<compile_context>
chip_gen: v6e
topology: v6e:2x2x1
jax: 0.10.0
libtpu: 0.0.40
codegen_flags: <defaults>
</compile_context>

<pallas_src>
import math

import jax
import jax.numpy as jnp
from jax.experimental import pallas as pl
from jax.experimental.pallas import tpu as pltpu


def _round_up(v, m):
    return ((v + m - 1) // m) * m


def _pick_tile(dim, cap, prefer_split=False):
    """Largest multiple of 128 <= cap that divides `dim` (dim is a multiple of
    128).  With prefer_split, keep >=2 tiles when dim allows it so a parallel
    grid axis can shard across v7x's two TensorCores."""
    limit = min(cap, dim)
    if prefer_split and dim >= 256:
        limit = min(limit, dim // 2)
    t = max(128, (limit // 128) * 128)
    while t > 128 and dim % t != 0:
        t -= 128
    return t


# ------------------------------- kernel -------------------------------------

def _linear_bias_kernel(x_ref, w_ref, b_ref, o_ref):
    # grid = (batch tiles, output tiles, K tiles); K (reduction) is last.
    k = pl.program_id(2)

    @pl.when(k == 0)
    def _():
        # Initialize the resident output tile with the broadcast bias.
        o_ref[...] = jnp.broadcast_to(b_ref[...], o_ref.shape)

    # x (tm, tk) . w (tk, tn) -> (tm, tn); f32 accumulation on the MXU,
    # accumulated directly into the f32 output block (no scratch).
    o_ref[...] += jnp.dot(x_ref[...], w_ref[...],
                          preferred_element_type=jnp.float32)


# ------------------------------- wrapper ------------------------------------

def prepare_noisy_linear(params, compute_dtype=jnp.bfloat16):
    """Run once per reset_noise / parameter update.

    Precomputes w_eff = w_mu + w_sigma * weight_epsilon and
    b_eff = b_mu + b_sigma * bias_epsilon, pads to 128-multiples,
    pre-transposes weights to (I, O) and casts to the streaming dtype.
    """
    O, I = params["weight_mu"].shape
    Op, Ip = _round_up(O, 128), _round_up(I, 128)

    w_eff = params["weight_mu"] + params["weight_sigma"] * params["weight_epsilon"]
    b_eff = params["bias_mu"] + params["bias_sigma"] * params["bias_epsilon"]

    def prep_w(w):                       # (O, I) -> (Ip, Op), compute dtype
        wp = jnp.pad(w, ((0, Op - O), (0, Ip - I)))
        return jnp.asarray(wp.T, dtype=compute_dtype)

    def prep_b(bv):                      # (O,) -> (1, Op) f32 (added post-MXU)
        return jnp.pad(bv.reshape(1, O), ((0, 0), (0, Op - O))).astype(jnp.float32)

    return dict(in_features=I, out_features=O, Ip=Ip, Op=Op,
                compute_dtype=compute_dtype,
                w_train=prep_w(w_eff), b_train=prep_b(b_eff),
                w_eval=prep_w(params["weight_mu"]),
                b_eval=prep_b(params["bias_mu"]))


def noisy_linear_forward(x, prepared, training=True):
    """x: (B, in_features) f32.  prepared: dict from prepare_noisy_linear."""
    B = x.shape[0]
    I, O = prepared["in_features"], prepared["out_features"]
    Ip, Op = prepared["Ip"], prepared["Op"]
    cdt = prepared["compute_dtype"]

    w = prepared["w_train"] if training else prepared["w_eval"]   # (Ip, Op)
    b = prepared["b_train"] if training else prepared["b_eval"]   # (1, Op) f32

    # Batch tile: a single tile up to 512 rows (so W streams once per forward).
    # bf16 packing needs the second-to-last block dim to be a multiple of 16.
    align_m = 8 if jnp.dtype(cdt) == jnp.dtype(jnp.float32) else 16
    tm = min(512, _round_up(B, align_m))
    Bp = _round_up(B, tm)
    # Output / reduction tiles: largest 128-multiples dividing the padded dims.
    tn = _pick_tile(Op, 512, prefer_split=(Bp // tm == 1))
    tk = _pick_tile(Ip, 1024)

    # Only the activation is padded per call (weights were prepared once).
    xp = jnp.pad(x, ((0, Bp - B), (0, Ip - I))).astype(cdt)

    grid = (Bp // tm, Op // tn, Ip // tk)
    isz = jnp.dtype(cdt).itemsize
    cost = pl.CostEstimate(
        flops=2 * Bp * Ip * Op,
        transcendentals=0,
        bytes_accessed=(Bp * Ip * isz                     # x
                        + (Bp // tm) * Ip * Op * isz      # W (re-streamed per batch tile)
                        + 4 * Op                          # bias
                        + 4 * Bp * Op))                   # output

    out = pl.pallas_call(
        _linear_bias_kernel,
        out_shape=jax.ShapeDtypeStruct((Bp, Op), jnp.float32),
        grid_spec=pltpu.PrefetchScalarGridSpec(
            num_scalar_prefetch=0,
            grid=grid,
            in_specs=[pl.BlockSpec((tm, tk), lambda i, j, k: (i, k)),
                      pl.BlockSpec((tk, tn), lambda i, j, k: (k, j)),
                      pl.BlockSpec((1, tn), lambda i, j, k: (0, j))],
            out_specs=pl.BlockSpec((tm, tn), lambda i, j, k: (i, j))),
        compiler_params=pltpu.CompilerParams(
            dimension_semantics=("parallel", "parallel", "arbitrary")),
        cost_estimate=cost,
    )(xp, w, b)

    return out[:B, :O].astype(x.dtype)


# --------------------- deterministic parameter/noise init ------------------

def _scale_noise(key, size):
    # PyTorch: x = randn(size); x.sign() * sqrt(|x|)
    x = jax.random.normal(key, (size,), dtype=jnp.float32)
    return jnp.sign(x) * jnp.sqrt(jnp.abs(x))


def init_noisy_linear(key, in_features, out_features, std_init=0.5):
    k_wmu, k_bmu, k_ein, k_eout = jax.random.split(key, 4)
    mu_range = 1.0 / math.sqrt(in_features)

    weight_mu = jax.random.uniform(
        k_wmu, (out_features, in_features), jnp.float32, -mu_range, mu_range)
    weight_sigma = jnp.full((out_features, in_features),
                            std_init / math.sqrt(in_features), jnp.float32)
    bias_mu = jax.random.uniform(
        k_bmu, (out_features,), jnp.float32, -mu_range, mu_range)
    bias_sigma = jnp.full((out_features,),
                          std_init / math.sqrt(out_features), jnp.float32)

    eps_in = _scale_noise(k_ein, in_features)
    eps_out = _scale_noise(k_eout, out_features)
    weight_epsilon = jnp.outer(eps_out, eps_in)
    bias_epsilon = eps_out

    return dict(weight_mu=weight_mu, weight_sigma=weight_sigma,
                weight_epsilon=weight_epsilon, bias_mu=bias_mu,
                bias_sigma=bias_sigma, bias_epsilon=bias_epsilon,
                eps_in=eps_in, eps_out=eps_out)


# ------------------------------ reference ----------------------------------

def noisy_linear_ref(x, p, training=True):
    if training:
        w = p["weight_mu"] + p["weight_sigma"] * p["weight_epsilon"]
        b = p["bias_mu"] + p["bias_sigma"] * p["bias_epsilon"]
    else:
        w, b = p["weight_mu"], p["bias_mu"]
    return x @ w.T + b


# -------------------------------- main --------------------------------------

if __name__ == "__main__":
    key = jax.random.PRNGKey(0)
    k1p, k1x, k2p, k2x = jax.random.split(key, 4)

    # Case 1: small shapes, f32 streaming path (tight tolerance, padding path).
    B1, I1, O1 = 8, 32, 16
    p1 = init_noisy_linear(k1p, I1, O1, std_init=0.5)
    prep1 = prepare_noisy_linear(p1, compute_dtype=jnp.float32)
    x1 = jax.random.normal(k1x, (B1, I1), dtype=jnp.float32)

    y1t = jax.block_until_ready(noisy_linear_forward(x1, prep1, training=True))
    assert jnp.allclose(y1t, noisy_linear_ref(x1, p1, True),
                        atol=1e-5, rtol=1e-5), "small train mismatch"
    y1e = jax.block_until_ready(noisy_linear_forward(x1, prep1, training=False))
    assert jnp.allclose(y1e, noisy_linear_ref(x1, p1, False),
                        atol=1e-5, rtol=1e-5), "small eval mismatch"

    # Case 2: larger shapes, bf16 streaming path (multi-tile output axis,
    # non-power-of-two K=640 handled with a single exact-size K tile).
    B2, I2, O2 = 16, 640, 384
    p2 = init_noisy_linear(k2p, I2, O2, std_init=0.5)
    prep2 = prepare_noisy_linear(p2, compute_dtype=jnp.bfloat16)
    x2 = jax.random.normal(k2x, (B2, I2), dtype=jnp.float32)

    y2t = jax.block_until_ready(noisy_linear_forward(x2, prep2, training=True))
    assert jnp.allclose(y2t, noisy_linear_ref(x2, p2, True),
                        atol=3e-2, rtol=3e-2), "bf16 train mismatch"
    y2e = jax.block_until_ready(noisy_linear_forward(x2, prep2, training=False))
    assert jnp.allclose(y2e, noisy_linear_ref(x2, p2, False),
                        atol=3e-2, rtol=3e-2), "bf16 eval mismatch"

    print("KERNEL_OK")
</pallas_src>

<mosaic_0001>
module attributes {stable_mosaic.version = 11 : i64} {
  func.func @_linear_bias_kernel(%arg0: i32, %arg1: i32, %arg2: i32, %arg3: memref<8x128xf32, #tpu.memory_space<vmem>>, %arg4: memref<128x128xf32, #tpu.memory_space<vmem>>, %arg5: memref<1x128xf32, #tpu.memory_space<vmem>>, %arg6: memref<8x128xf32, #tpu.memory_space<vmem>>) attributes {dimension_semantics = [#tpu.dimension_semantics<parallel>, #tpu.dimension_semantics<parallel>, #tpu.dimension_semantics<arbitrary>], iteration_bounds = array<i64: 1, 1, 1>, scalar_prefetch = 0 : i64, scratch_operands = 0 : i64, tpu.core_type = #tpu.core_type<tc>, window_params = [{transform_indices = @transform_0, window_bounds = array<i64: 8, 128>}, {transform_indices = @transform_1, window_bounds = array<i64: 128, 128>}, {transform_indices = @transform_2, window_bounds = array<i64: 1, 128>}, {transform_indices = @transform_3, window_bounds = array<i64: 8, 128>}]} {
    %c0_i32 = arith.constant 0 : i32
    %0 = arith.cmpi eq, %arg2, %c0_i32 : i32
    %1 = arith.extui %0 : i1 to i32
    %c0_i32_0 = arith.constant 0 : i32
    %2 = arith.cmpi ne, %1, %c0_i32_0 : i32
    scf.if %2 {
      %c0_8 = arith.constant 0 : index
      %c0_9 = arith.constant 0 : index
      %9 = vector.load %arg5[%c0_8, %c0_9] : memref<1x128xf32, #tpu.memory_space<vmem>>, vector<1x128xf32>
      %10 = vector.shape_cast %9 : vector<1x128xf32> to vector<1x128xf32>
      %11 = vector.broadcast %10 : vector<1x128xf32> to vector<8x128xf32>
      %c0_10 = arith.constant 0 : index
      %c0_11 = arith.constant 0 : index
      %12 = vector.load %arg6[%c0_10, %c0_11] : memref<8x128xf32, #tpu.memory_space<vmem>>, vector<8x128xf32>
      tpu.vector_store %arg6[%c0_10, %c0_11], %11 {strides = array<i32>} : memref<8x128xf32, #tpu.memory_space<vmem>>, vector<8x128xf32>,
    } else {
    }
    %c0 = arith.constant 0 : index
    %c0_1 = arith.constant 0 : index
    %3 = vector.load %arg6[%c0, %c0_1] : memref<8x128xf32, #tpu.memory_space<vmem>>, vector<8x128xf32>
    %c0_2 = arith.constant 0 : index
    %c0_3 = arith.constant 0 : index
    %4 = vector.load %arg3[%c0_2, %c0_3] : memref<8x128xf32, #tpu.memory_space<vmem>>, vector<8x128xf32>
    %c0_4 = arith.constant 0 : index
    %c0_5 = arith.constant 0 : index
    %5 = vector.load %arg4[%c0_4, %c0_5] : memref<128x128xf32, #tpu.memory_space<vmem>>, vector<128x128xf32>
    %cst = arith.constant dense<0.000000e+00> : vector<8x128xf32>
    %6 = tpu.matmul %4, %5, %cst {dimension_numbers = #tpu.dot_dimension_numbers<[1], [0], [0], [1], [0, 0, 1, 1], [], []>} : vector<8x128xf32>, vector<128x128xf32>, vector<8x128xf32> -> vector<8x128xf32>
    %7 = arith.addf %3, %6 : vector<8x128xf32>
    %c0_6 = arith.constant 0 : index
    %c0_7 = arith.constant 0 : index
    %8 = vector.load %arg6[%c0_6, %c0_7] : memref<8x128xf32, #tpu.memory_space<vmem>>, vector<8x128xf32>
    tpu.vector_store %arg6[%c0_6, %c0_7], %7 {strides = array<i32>} : memref<8x128xf32, #tpu.memory_space<vmem>>, vector<8x128xf32>,
    return
  }
  func.func @transform_0(%arg0: i32, %arg1: i32, %arg2: i32) -> (i32, i32) {
    %c0_i32 = arith.constant 0 : i32
    return %arg0, %arg2 : i32, i32
  }
  func.func @transform_1(%arg0: i32, %arg1: i32, %arg2: i32) -> (i32, i32) {
    %c0_i32 = arith.constant 0 : i32
    return %arg2, %arg1 : i32, i32
  }
  func.func @transform_2(%arg0: i32, %arg1: i32, %arg2: i32) -> (i32, i32) {
    %c0_i32 = arith.constant 0 : i32
    %c0_i32_0 = arith.constant 0 : i32
    return %c0_i32, %arg1 : i32, i32
  }
  func.func @transform_3(%arg0: i32, %arg1: i32, %arg2: i32) -> (i32, i32) {
    %c0_i32 = arith.constant 0 : i32
    return %arg0, %arg1 : i32, i32
  }
}

</mosaic_0001>

<llo_original>
// kernel: tpu_custom_call.1
$region0: #{tpu_custom_call.1}
  #allocation0 [shape = 'u32[]', space=smem, size = 0x4, offset = 0x4, fixed_abs, tag = 'smem constant byte address 0x4 - core index']
  #allocation1 [shape = 'u32[144,128]{1,0:T(1,128)}', space=vmem, size = 0x12000, scoped, tag = 'internal scratch']
  %s0 = inlined_call_operand.hbm [shape: f32[8,128], index: 0, kind: input, shape index: {}]
  %s1 = inlined_call_operand.hbm [shape: f32[128,128], index: 1, kind: input, shape index: {}]
  %s2 = inlined_call_operand.vmem [shape: f32[1,128], index: 2, kind: input, shape index: {}]
  %s3 = inlined_call_operand.hbm [shape: f32[8,128], index: 3, kind: output, shape index: {}]
  %s4 = sld [smem:[#allocation0]]
  $region34: #{tpu_custom_call.1} parent=0
    _
  %s6 = ssub.s32 1, %s4
  %s7 = scalar_select 0, %s6, %s4
  $region1: #{tpu_custom_call.1} parent=0
    #allocation2 [shape = 'u8[4096]{0}', space=vmem, size = 0x1000, scoped, tag = 'input window, operand 0, single buffered']
    #allocation3 [shape = 's32[1]{0}', space=sflag, size = 0x4, scoped, tag = 'scoped memory for tpu_custom_call.1']
    #allocation4 [shape = 's32[1]{0}', space=sflag, size = 0x4, scoped, tag = 'scoped memory for tpu_custom_call.1']
    #allocation5 [shape = 'u8[65536]{0}', space=vmem, size = 0x10000, scoped, tag = 'input window, operand 1, single buffered']
    #allocation6 [shape = 's32[1]{0}', space=sflag, size = 0x4, scoped, tag = 'scoped memory for tpu_custom_call.1']
    #allocation7 [shape = 'u8[4096]{0}', space=vmem, size = 0x1000, scoped, tag = 'output window, operand 0, single buffered']
    %8 = vsyncpa [#allocation3], 0
    %9 = vsyncpa [#allocation6], 0
    %10 = vsyncpa [#allocation4], 0
    // Predicated region
    $region2: #{tpu_custom_call.1} parent=1 // pred_check
      _
    $region3: #{tpu_custom_call.1} parent=1 // pred_check_branch
      %12 = sbr.rel (0) target = $region5
    $region4: #{tpu_custom_call.1} parent=1 // pred_region
      %s14 = ssub.s32 128, 128
      %15 = vsyncadd [#allocation3], %s14
      %s17 = sshll.u32 [#allocation2], 4
      %s18 = int_to_ptr.vmem [resolvable:$true] %s17
      %20 = dma.hbm_to_vmem [thread:$0]  %s0, 128, %s18, [#allocation3]
    $region5: #{tpu_custom_call.1} parent=1 // pred_fallthru
      _
    // Predicated region
    $region6: #{tpu_custom_call.1} parent=1 // pred_check
      _
    $region7: #{tpu_custom_call.1} parent=1 // pred_check_branch
      %22 = sbr.rel (0) target = $region9
    $region8: #{tpu_custom_call.1} parent=1 // pred_region
      %s24 = ssub.s32 2048, 2048
      %25 = vsyncadd [#allocation6], %s24
      %s26 = sshll.u32 [#allocation5], 4
      %s27 = int_to_ptr.vmem [resolvable:$true] %s26
      %32 = dma.hbm_to_vmem [thread:$0]  %s1, 2048, %s27, [#allocation6], 128, 128, 8
    $region9: #{tpu_custom_call.1} parent=1 // pred_fallthru
      _
    // Predicated region
    $region10: #{tpu_custom_call.1} parent=1 // pred_check
      _
    $region11: #{tpu_custom_call.1} parent=1 // pred_check_branch
      %34 = sbr.rel (0) target = $region13
    $region12: #{tpu_custom_call.1} parent=1 // pred_region
      _
    $region13: #{tpu_custom_call.1} parent=1 // pred_fallthru
      _
    // Predicated region
    $region14: #{tpu_custom_call.1} parent=1 // pred_check
      _
    $region15: #{tpu_custom_call.1} parent=1 // pred_check_branch
      %36 = sbr.rel (0) target = $region17
    $region16: #{tpu_custom_call.1} parent=1 // pred_region
      %37 = dma.done [#allocation3], 128
    $region17: #{tpu_custom_call.1} parent=1 // pred_fallthru
      _
    // Predicated region
    $region18: #{tpu_custom_call.1} parent=1 // pred_check
      _
    $region19: #{tpu_custom_call.1} parent=1 // pred_check_branch
      %39 = sbr.rel (0) target = $region21
    $region20: #{tpu_custom_call.1} parent=1 // pred_region
      %40 = dma.done [#allocation6], 2048
    $region21: #{tpu_custom_call.1} parent=1 // pred_fallthru
      _
    %p41 = scmp.eq.s32.totalorder 0, 0
    // Predicated region
    $region22: #{tpu_custom_call.1} parent=1 // pred_check
      %p42 = pneg %p41
    $region23: #{tpu_custom_call.1} parent=1 // pred_check_branch
      %44 = sbr.rel (%p42) target = $region25
    $region24: #{tpu_custom_call.1} parent=1 // pred_region
      %v45 = vld [vmem:[%s2] sm:$0x1]
      %v47 = vlaneseq
      %v48 = vshrl.u32 %v47, 7
      %v49 = vsub.s32 0, %v48
      %v50 = vrot.slane %v45, %v49
      %52 = vst [vmem:[#allocation7] sm:$0xff] %v50
    $region25: #{tpu_custom_call.1} parent=1 // pred_fallthru
      _
    %v53 = vld [vmem:[#allocation7] sm:$0xff]
    %v54 = vld [vmem:[#allocation2] sm:$0xff]
    %v55 = vld [vmem:[#allocation5] sm:$0xff]
    %v56 = vld [vmem:[#allocation5 + $0x8] sm:$0xff]
    %v57 = vld [vmem:[#allocation5 + $0x10] sm:$0xff]
    %v58 = vld [vmem:[#allocation5 + $0x18] sm:$0xff]
    %v59 = vld [vmem:[#allocation5 + $0x20] sm:$0xff]
    %v60 = vld [vmem:[#allocation5 + $0x28] sm:$0xff]
    %v61 = vld [vmem:[#allocation5 + $0x30] sm:$0xff]
    %v62 = vld [vmem:[#allocation5 + $0x38] sm:$0xff]
    %v63 = vld [vmem:[#allocation5 + $0x40] sm:$0xff]
    %v64 = vld [vmem:[#allocation5 + $0x48] sm:$0xff]
    %v65 = vld [vmem:[#allocation5 + $0x50] sm:$0xff]
    %v66 = vld [vmem:[#allocation5 + $0x58] sm:$0xff]
    %v67 = vld [vmem:[#allocation5 + $0x60] sm:$0xff]
    %v68 = vld [vmem:[#allocation5 + $0x68] sm:$0xff]
    %v69 = vld [vmem:[#allocation5 + $0x70] sm:$0xff]
    %v70 = vld [vmem:[#allocation5 + $0x78] sm:$0xff]
    %71 = vmatprep.subr.mxu0 0.0
    %72 = vmatpush1.msra.mxu0 %v70
    %73 = vmatprep.subr.mxu0 0.0
    %74 = vmatpush1.msra.mxu0 %v69
    %75 = vmatprep.subr.mxu0 0.0
    %76 = vmatpush1.msra.mxu0 %v68
    %77 = vmatprep.subr.mxu0 0.0
    %78 = vmatpush1.msra.mxu0 %v67
    %79 = vmatprep.subr.mxu0 0.0
    %80 = vmatpush1.msra.mxu0 %v66
    %81 = vmatprep.subr.mxu0 0.0
    %82 = vmatpush1.msra.mxu0 %v65
    %83 = vmatprep.subr.mxu0 0.0
    %84 = vmatpush1.msra.mxu0 %v64
    %85 = vmatprep.subr.mxu0 0.0
    %86 = vmatpush1.msra.mxu0 %v63
    %87 = vmatprep.subr.mxu0 0.0
    %88 = vmatpush1.msra.mxu0 %v62
    %89 = vmatprep.subr.mxu0 0.0
    %90 = vmatpush1.msra.mxu0 %v61
    %91 = vmatprep.subr.mxu0 0.0
    %92 = vmatpush1.msra.mxu0 %v60
    %93 = vmatprep.subr.mxu0 0.0
    %94 = vmatpush1.msra.mxu0 %v59
    %95 = vmatprep.subr.mxu0 0.0
    %96 = vmatpush1.msra.mxu0 %v58
    %97 = vmatprep.subr.mxu0 0.0
    %98 = vmatpush1.msra.mxu0 %v57
    %99 = vmatprep.subr.mxu0 0.0
    %100 = vmatpush1.msra.mxu0 %v56
    %101 = vmatprep.subr.mxu0 0.0
    %102 = vmatpush1.msra.mxu0 %v55
    %103 = vmatprep.subr.mxu0 0.0
    %104 = vmatpush2.msra.mxu0 0.0
    %105 = vmatprep.subr.mxu0 0.0
    %106 = vmatpush2.msra.mxu0 0.0
    %107 = vmatprep.subr.mxu0 0.0
    %108 = vmatpush2.msra.mxu0 0.0
    %109 = vmatprep.subr.mxu0 0.0
    %110 = vmatpush2.msra.mxu0 0.0
    %111 = vmatprep.subr.mxu0 0.0
    %112 = vmatpush2.msra.mxu0 0.0
    %113 = vmatprep.subr.mxu0 0.0
    %114 = vmatpush2.msra.mxu0 0.0
    %115 = vmatprep.subr.mxu0 0.0
    %116 = vmatpush2.msra.mxu0 0.0
    %117 = vmatprep.subr.mxu0 0.0
    %118 = vmatpush2.msra.mxu0 0.0
    %119 = vmatprep.subr.mxu0 0.0
    %120 = vmatpush2.msra.mxu0 0.0
    %121 = vmatprep.subr.mxu0 0.0
    %122 = vmatpush2.msra.mxu0 0.0
    %123 = vmatprep.subr.mxu0 0.0
    %124 = vmatpush2.msra.mxu0 0.0
    %125 = vmatprep.subr.mxu0 0.0
    %126 = vmatpush2.msra.mxu0 0.0
    %127 = vmatprep.subr.mxu0 0.0
    %128 = vmatpush2.msra.mxu0 0.0
    %129 = vmatprep.subr.mxu0 0.0
    %130 = vmatpush2.msra.mxu0 0.0
    %131 = vmatprep.subr.mxu0 0.0
    %132 = vmatpush2.msra.mxu0 0.0
    %133 = vmatprep.subr.mxu0 0.0
    %134 = vmatpush2.msra.mxu0 0.0
    %135 = vmatprep.mubr.f32.mxu0 0.0
    %136 = vmatmul.mubr.f32.gmra.mxu0 %v54
    %v137 = vpop.f32.mrf.mxu0
    %v138 = vadd.f32 0.0, %v137
    %v139 = vpop.f32.mrf.mxu0
    %140 = vdwg.mxu0
    %v141 = vadd.f32 %v53, %v138
    %142 = vst [vmem:[#allocation7] sm:$0xff] %v141
    // Predicated region
    $region26: #{tpu_custom_call.1} parent=1 // pred_check
      _
    $region27: #{tpu_custom_call.1} parent=1 // pred_check_branch
      %144 = sbr.rel (0) target = $region29
    $region28: #{tpu_custom_call.1} parent=1 // pred_region
      %s146 = ssub.s32 128, 128
      %147 = vsyncadd [#allocation4], %s146
      %s149 = sshll.u32 [#allocation7], 4
      %s150 = int_to_ptr.vmem [resolvable:$true] %s149
      %152 = dma.vmem_to_hbm [thread:$0]  %s150, 128, %s3, [#allocation4]
    $region29: #{tpu_custom_call.1} parent=1 // pred_fallthru
      _
    // Predicated region
    $region30: #{tpu_custom_call.1} parent=1 // pred_check
      _
    $region31: #{tpu_custom_call.1} parent=1 // pred_check_branch
      %154 = sbr.rel (0) target = $region33
    $region32: #{tpu_custom_call.1} parent=1 // pred_region
      %155 = dma.done [#allocation4], 128
    $region33: #{tpu_custom_call.1} parent=1 // pred_fallthru
      _
    %156 = vsyncpa [#allocation3], 1
    %157 = vsyncpa [#allocation6], 1
    %158 = vsyncpa [#allocation4], 1

</llo_original>
